<compile_context>
chip_gen: v7x
topology: tpu7x:2x2x1
jax: 0.10.0
libtpu: 0.0.40
codegen_flags: <defaults>
</compile_context>

<pallas_src>
import functools

import jax
import jax.numpy as jnp
from jax import lax
from jax.experimental import pallas as pl
from jax.experimental.pallas import tpu as pltpu

_LANES = 128
# 2048 rows * 128 lanes * 4 B = 1 MiB per f32 input block.
# Training: 3 inputs * 2 pipeline buffers * 1 MiB = 6 MiB VMEM  (< 16/32/32 MiB
# default scoped VMEM on v5e / v6e / v7x), eval: 4 MiB.
_MAX_TILE_ROWS = 2048


# ----------------------------- in-kernel helpers ---------------------------

def _element_mask(shape, block_row0, n_valid):
    """Validity mask for a (tile_rows, 128) tile whose first row is global row
    `block_row0` of the flattened tensor.  int32 index math is fine for tensors
    below ~2^31 elements (a loss input is far below that)."""
    row = lax.broadcasted_iota(jnp.int32, shape, 0)
    col = lax.broadcasted_iota(jnp.int32, shape, 1)
    gidx = (block_row0 + row) * _LANES + col
    return gidx < n_valid


def _make_eval_kernel(tile_rows, bpp, n_elems, needs_mask):
    """Eval mode: per-lane partial sums of (pred - target)^2, stacked into row 0
    of the resident (8,128) accumulator block with ONE full-block update."""
    def kernel(pred_ref, tgt_ref, out_ref):
        @pl.when(pl.program_id(1) == 0)
        def _init():
            out_ref[...] = jnp.zeros_like(out_ref)

        d = pred_ref[...].astype(jnp.float32) - tgt_ref[...].astype(jnp.float32)
        if needs_mask:
            blk = pl.program_id(0) * bpp + pl.program_id(1)
            d = jnp.where(_element_mask(d.shape, blk * tile_rows, n_elems), d, 0.0)

        partial = jnp.concatenate(
            [jnp.sum(d * d, axis=0, keepdims=True),
             jnp.zeros((7, _LANES), jnp.float32)], axis=0)
        out_ref[...] += partial                       # single unmasked (8,128) RMW
    return kernel


def _make_stats_kernel(tile_rows, bpp, n_elems, needs_mask):
    """Training mode, single fused HBM pass.  Per-lane partial sums (d = pred - target):
         row0: t    row1: t^2    row2: d^2    row3: d*noise    row4: noise^2
       The wrapper combines them into mse(pred, target + smoothing*std(target)*noise)."""
    def kernel(pred_ref, tgt_ref, noise_ref, out_ref):
        @pl.when(pl.program_id(1) == 0)
        def _init():
            out_ref[...] = jnp.zeros_like(out_ref)

        p = pred_ref[...].astype(jnp.float32)          # native-dtype stream, VPU upcast
        t = tgt_ref[...].astype(jnp.float32)
        nz = noise_ref[...].astype(jnp.float32)
        d = p - t
        if needs_mask:
            blk = pl.program_id(0) * bpp + pl.program_id(1)
            mask = _element_mask(p.shape, blk * tile_rows, n_elems)
            t = jnp.where(mask, t, 0.0)
            d = jnp.where(mask, d, 0.0)
            nz = jnp.where(mask, nz, 0.0)

        partial = jnp.concatenate(
            [jnp.sum(t, axis=0, keepdims=True),
             jnp.sum(t * t, axis=0, keepdims=True),
             jnp.sum(d * d, axis=0, keepdims=True),
             jnp.sum(d * nz, axis=0, keepdims=True),
             jnp.sum(nz * nz, axis=0, keepdims=True),
             jnp.zeros((3, _LANES), jnp.float32)], axis=0)
        out_ref[...] += partial                       # single unmasked (8,128) RMW
    return kernel


# ----------------------------- wrapper glue ---------------------------------

def _as_lanes(x):
    """Flatten -> (rows, 128) lane-dense view in the NATIVE dtype.  Copy-free when
    numel % 128 == 0; otherwise only the final <128-element tail forces a pad
    (contents irrelevant: the in-kernel mask zeroes anything past numel)."""
    flat = x.reshape(-1)
    rem = flat.shape[0] % _LANES
    if rem:
        flat = jnp.pad(flat, (0, _LANES - rem))
    return flat.reshape(flat.shape[0] // _LANES, _LANES)


def noise_layout(target_shape):
    """Packed (rows, 128) shape to pre-draw the randn noise in (skips pad/reshape)."""
    n = 1
    for d in target_shape:
        n *= int(d)
    return (pl.cdiv(n, _LANES), _LANES)


def _reduction_call(kernel, inputs, *, tile_rows, blocks, n_par, bpp):
    clamp = (n_par * bpp != blocks)     # overhanging blocks (masked in-kernel)

    def in_map(c, i):
        b = c * bpp + i
        if clamp:
            b = jnp.minimum(b, blocks - 1)   # keep DMA in-bounds; mask zeroes it
        return (b, 0)

    out = pl.pallas_call(
        kernel,
        out_shape=jax.ShapeDtypeStruct((n_par * 8, _LANES), jnp.float32),
        grid=(n_par, bpp),
        in_specs=[pl.BlockSpec((tile_rows, _LANES), in_map) for _ in inputs],
        out_specs=pl.BlockSpec((8, _LANES), lambda c, i: (c, 0)),
        compiler_params=pltpu.CompilerParams(
            dimension_semantics=("parallel", "arbitrary")),
    )(*inputs)
    # tiny (n_par,8,128) -> (8,) lane/core reduction: wrapper glue
    return out.reshape(n_par, 8, _LANES).sum(axis=(0, 2))


def label_smoothing_loss(pred, target, noise=None, *, smoothing=0.1,
                         training=False, rng_key=None,
                         max_tile_rows=_MAX_TILE_ROWS):
    """JAX/Pallas port of LabelSmoothingLoss.forward.

    `training` models nn.Module.training.  `noise` plays the role of
    torch.randn_like(target); it may be given in target.shape or directly in the
    packed `noise_layout(target.shape)` layout (preferred, zero-copy)."""
    assert pred.shape == target.shape
    n_elems = 1
    for d_ in pred.shape:
        n_elems *= int(d_)
    n = jnp.float32(n_elems)

    p2 = _as_lanes(pred)
    t2 = _as_lanes(target)
    rows = p2.shape[0]

    # Full-extent block for small inputs (always legal); else 2048-row blocks
    # (multiple of 32 -> valid sublane packing for f32/bf16/int8 streams).
    tile_rows = rows if rows <= max_tile_rows else max_tile_rows
    blocks = pl.cdiv(rows, tile_rows)
    n_par = 2 if blocks >= 2 else 1            # both v7x TCs; no-op on v5e/v6e
    bpp = pl.cdiv(blocks, n_par)
    needs_mask = (n_par * bpp * tile_rows * _LANES != n_elems)

    if training and smoothing > 0:
        if noise is None:
            key = jax.random.PRNGKey(0) if rng_key is None else rng_key
            noise = jax.random.normal(key, (rows, _LANES), jnp.float32)
        nz2 = noise if noise.shape == (rows, _LANES) else _as_lanes(noise)

        kernel = _make_stats_kernel(tile_rows, bpp, n_elems, needs_mask)
        sums = _reduction_call(kernel, (p2, t2, nz2), tile_rows=tile_rows,
                               blocks=blocks, n_par=n_par, bpp=bpp)
        s_t, s_t2, s_d2, s_dn, s_n2 = sums[0], sums[1], sums[2], sums[3], sums[4]

        # torch.Tensor.std(): unbiased (correction = 1).  NOTE: one-pass variance in
        # f32 can lose precision for huge tensors with large means; acceptable for a loss.
        var = (s_t2 - s_t * s_t / n) / (n - 1.0)
        std = jnp.sqrt(jnp.maximum(var, 0.0))
        s = jnp.float32(smoothing) * std
        # mse(pred, target + s*noise) = (sum d^2 - 2 s sum(d n) + s^2 sum(n^2)) / N
        return (s_d2 - 2.0 * s * s_dn + s * s * s_n2) / n

    kernel = _make_eval_kernel(tile_rows, bpp, n_elems, needs_mask)
    sums = _reduction_call(kernel, (p2, t2), tile_rows=tile_rows,
                           blocks=blocks, n_par=n_par, bpp=bpp)
    return sums[0] / n


# ----------------------------- reference (pure JAX) ------------------------

def reference_loss(pred, target, noise, smoothing, training):
    pred = pred.astype(jnp.float32)
    target = target.astype(jnp.float32)
    if training and smoothing > 0:
        std = jnp.std(target, ddof=1)              # unbiased, like torch .std()
        target = target + noise.astype(jnp.float32) * smoothing * std
    return jnp.mean((pred - target) ** 2)


# ----------------------------- main ----------------------------------------

if __name__ == "__main__":
    key = jax.random.PRNGKey(0)
    k1, k2, k3, k4, k5, k6 = jax.random.split(key, 6)
    smoothing = 0.1

    def check(got, want, rtol, atol, tag):
        assert jnp.allclose(got, want, rtol=rtol, atol=atol), (tag, got, want)

    # ---- 1) density-map style count regression: (B,1,H,W) f32, jitted --------
    shape = (2, 1, 32, 32)
    pred = jax.random.normal(k1, shape, jnp.float32) * 2.0 + 5.0
    target = jax.random.normal(k2, shape, jnp.float32) * 2.0 + 5.0
    noise_pk = jax.random.normal(k3, noise_layout(shape), jnp.float32)   # packed draw
    noise_full = noise_pk.reshape(-1)[: pred.size].reshape(shape)

    eval_fn = jax.jit(functools.partial(label_smoothing_loss,
                                        smoothing=smoothing, training=False))
    train_fn = jax.jit(functools.partial(label_smoothing_loss,
                                         smoothing=smoothing, training=True))

    loss_eval = jax.block_until_ready(eval_fn(pred, target))
    check(loss_eval, reference_loss(pred, target, None, smoothing, False),
          1e-5, 1e-6, "eval f32")

    loss_train = jax.block_until_ready(train_fn(pred, target, noise_pk))
    check(loss_train, reference_loss(pred, target, noise_full, smoothing, True),
          2e-4, 1e-5, "train f32")

    # ---- 2) ragged size (numel % 128 != 0): exercises the in-kernel tail mask --
    shape2 = (3, 1, 17, 19)                      # 969 elements
    pred2 = jax.random.normal(k4, shape2, jnp.float32)
    target2 = jax.random.normal(k5, shape2, jnp.float32) + 1.5
    noise2_pk = jax.random.normal(k6, noise_layout(shape2), jnp.float32)
    noise2_full = noise2_pk.reshape(-1)[: pred2.size].reshape(shape2)

    check(label_smoothing_loss(pred2, target2, smoothing=smoothing, training=False),
          reference_loss(pred2, target2, None, smoothing, False),
          1e-5, 1e-6, "eval ragged")
    check(label_smoothing_loss(pred2, target2, noise=noise2_pk,
                               smoothing=smoothing, training=True),
          reference_loss(pred2, target2, noise2_full, smoothing, True),
          2e-4, 1e-5, "train ragged")

    # ---- 3) multi-block + 2-way parallel accumulator path (small forced tiles) --
    shape3 = (4, 1, 32, 32)                      # 32 rows, tile_rows=8 -> grid (2,2)
    pred3 = jax.random.normal(k1, shape3, jnp.float32)
    target3 = jax.random.normal(k2, shape3, jnp.float32) + 2.0
    noise3_pk = jax.random.normal(k3, noise_layout(shape3), jnp.float32)
    noise3_full = noise3_pk.reshape(-1)[: pred3.size].reshape(shape3)
    check(label_smoothing_loss(pred3, target3, noise=noise3_pk, smoothing=smoothing,
                               training=True, max_tile_rows=8),
          reference_loss(pred3, target3, noise3_full, smoothing, True),
          2e-4, 1e-5, "train multi-block parallel")

    # ---- 4) odd block count: clamped overhang block must be fully masked out ----
    shape4 = (3, 1, 32, 32)                      # 24 rows, tile_rows=8 -> 3 blocks
    pred4 = jax.random.normal(k4, shape4, jnp.float32)
    target4 = jax.random.normal(k5, shape4, jnp.float32)
    check(label_smoothing_loss(pred4, target4, training=False, max_tile_rows=8),
          reference_loss(pred4, target4, None, smoothing, False),
          1e-5, 1e-6, "eval clamped overhang")

    # ---- 5) bf16 inputs streamed natively (upcast on the VPU inside the kernel) --
    check(label_smoothing_loss(pred.astype(jnp.bfloat16), target.astype(jnp.bfloat16),
                               training=False),
          reference_loss(pred.astype(jnp.bfloat16), target.astype(jnp.bfloat16),
                         None, smoothing, False),
          1e-4, 1e-5, "eval bf16")

    print("KERNEL_OK")
</pallas_src>

<mosaic_0001>
module attributes {stable_mosaic.version = 11 : i64} {
  func.func @kernel(%arg0: i32, %arg1: i32, %arg2: memref<16x128xf32, #tpu.memory_space<vmem>>, %arg3: memref<16x128xf32, #tpu.memory_space<vmem>>, %arg4: memref<8x128xf32, #tpu.memory_space<vmem>>) attributes {dimension_semantics = [#tpu.dimension_semantics<parallel>, #tpu.dimension_semantics<arbitrary>], iteration_bounds = array<i64: 1, 1>, scalar_prefetch = 0 : i64, scratch_operands = 0 : i64, tpu.core_type = #tpu.core_type<tc>, window_params = [{transform_indices = @transform_0, window_bounds = array<i64: 16, 128>}, {transform_indices = @transform_1, window_bounds = array<i64: 16, 128>}, {transform_indices = @transform_2, window_bounds = array<i64: 8, 128>}]} {
    %c0_i32 = arith.constant 0 : i32
    %0 = arith.cmpi eq, %arg1, %c0_i32 : i32
    %1 = arith.extui %0 : i1 to i32
    %c0_i32_0 = arith.constant 0 : i32
    %2 = arith.cmpi ne, %1, %c0_i32_0 : i32
    scf.if %2 {
      %cst_9 = arith.constant 0.000000e+00 : f32
      %14 = vector.broadcast %cst_9 : f32 to vector<8x128xf32>
      %c0_10 = arith.constant 0 : index
      %c0_11 = arith.constant 0 : index
      %15 = vector.load %arg4[%c0_10, %c0_11] : memref<8x128xf32, #tpu.memory_space<vmem>>, vector<8x128xf32>
      tpu.vector_store %arg4[%c0_10, %c0_11], %14 {strides = array<i32>} : memref<8x128xf32, #tpu.memory_space<vmem>>, vector<8x128xf32>,
    } else {
    }
    %c0 = arith.constant 0 : index
    %c0_1 = arith.constant 0 : index
    %3 = vector.load %arg2[%c0, %c0_1] : memref<16x128xf32, #tpu.memory_space<vmem>>, vector<16x128xf32>
    %c0_2 = arith.constant 0 : index
    %c0_3 = arith.constant 0 : index
    %4 = vector.load %arg3[%c0_2, %c0_3] : memref<16x128xf32, #tpu.memory_space<vmem>>, vector<16x128xf32>
    %5 = arith.subf %3, %4 : vector<16x128xf32>
    %6 = arith.mulf %5, %5 : vector<16x128xf32>
    %cst = arith.constant dense<0.000000e+00> : vector<128xf32>
    %7 = vector.multi_reduction <add>, %6, %cst [0] : vector<16x128xf32> to vector<128xf32>
    %8 = vector.shape_cast %7 : vector<128xf32> to vector<1x128xf32>
    %cst_4 = arith.constant 0.000000e+00 : f32
    %9 = vector.broadcast %cst_4 : f32 to vector<7x128xf32>
    %10 = tpu.concatenate %8, %9 in 0 : vector<1x128xf32>, vector<7x128xf32> -> vector<8x128xf32>
    %c0_5 = arith.constant 0 : index
    %c0_6 = arith.constant 0 : index
    %11 = vector.load %arg4[%c0_5, %c0_6] : memref<8x128xf32, #tpu.memory_space<vmem>>, vector<8x128xf32>
    %12 = arith.addf %11, %10 : vector<8x128xf32>
    %c0_7 = arith.constant 0 : index
    %c0_8 = arith.constant 0 : index
    %13 = vector.load %arg4[%c0_7, %c0_8] : memref<8x128xf32, #tpu.memory_space<vmem>>, vector<8x128xf32>
    tpu.vector_store %arg4[%c0_7, %c0_8], %12 {strides = array<i32>} : memref<8x128xf32, #tpu.memory_space<vmem>>, vector<8x128xf32>,
    return
  }
  func.func @transform_0(%arg0: i32, %arg1: i32) -> (i32, i32) {
    %c1_i32 = arith.constant 1 : i32
    %0 = arith.muli %arg0, %c1_i32 : i32
    %1 = arith.addi %0, %arg1 : i32
    %c0_i32 = arith.constant 0 : i32
    %c0_i32_0 = arith.constant 0 : i32
    return %1, %c0_i32 : i32, i32
  }
  func.func @transform_1(%arg0: i32, %arg1: i32) -> (i32, i32) {
    %c1_i32 = arith.constant 1 : i32
    %0 = arith.muli %arg0, %c1_i32 : i32
    %1 = arith.addi %0, %arg1 : i32
    %c0_i32 = arith.constant 0 : i32
    %c0_i32_0 = arith.constant 0 : i32
    return %1, %c0_i32 : i32, i32
  }
  func.func @transform_2(%arg0: i32, %arg1: i32) -> (i32, i32) {
    %c0_i32 = arith.constant 0 : i32
    %c0_i32_0 = arith.constant 0 : i32
    return %arg0, %c0_i32 : i32, i32
  }
}

</mosaic_0001>

<llo_original>
// kernel: label_smoothing_loss.1
$region0: #{label_smoothing_loss.1}
  #allocation0 [shape = 'u32[]', space=smem, size = 0x4, offset = 0x4, fixed_abs, tag = 'smem constant byte address 0x4 - core index']
  #allocation1 [shape = 'u32[144,128]{1,0:T(1,128)}', space=vmem, size = 0x12000, scoped, tag = 'internal scratch']
  %s0 = inlined_call_operand.vmem [shape: f32[16,128], index: 0, kind: input, shape index: {}]
  %s1 = inlined_call_operand.vmem [shape: f32[16,128], index: 1, kind: input, shape index: {}]
  %s2 = inlined_call_operand.vmem [shape: f32[8,128], index: 2, kind: output, shape index: {}]
  %s3 = sld [smem:[#allocation0]]
  $region22: #{label_smoothing_loss.1} parent=0
    _
  %s5 = ssub.s32 1, %s3
  %s6 = scalar_select 0, %s5, %s3
  // Predicated region
  $region2: #{label_smoothing_loss.1} parent=0 // pred_check
    _
  $region3: #{label_smoothing_loss.1} parent=0 // pred_check_branch
    %8 = sbr.rel (0) target = $region5
  $region4: #{label_smoothing_loss.1} parent=0 // pred_region
    %s9 = sadd.s32 0, 0
    %s10 = smul.u32 2, %s9
    %p11 = scmp.lt.s32.totalorder %s10, 1
    %s12 = scalar_select %p11, %s10, 1
    %s13 = smul.addr %s12, 8
    %s14 = scalar_lea.vmem %s0, %s13
    %s15 = sadd.s32 0, 0
    %s16 = smul.u32 2, %s15
  $region5: #{label_smoothing_loss.1} parent=0 // pred_fallthru
    _
  // Predicated region
  $region6: #{label_smoothing_loss.1} parent=0 // pred_check
    _
  $region7: #{label_smoothing_loss.1} parent=0 // pred_check_branch
    %18 = sbr.rel (0) target = $region9
  $region8: #{label_smoothing_loss.1} parent=0 // pred_region
    %s19 = sadd.s32 0, 0
    %s20 = smul.u32 2, %s19
    %p21 = scmp.lt.s32.totalorder %s20, 1
    %s22 = scalar_select %p21, %s20, 1
    %s23 = smul.addr %s22, 8
    %s24 = scalar_lea.vmem %s1, %s23
    %s25 = sadd.s32 0, 0
    %s26 = smul.u32 2, %s25
  $region9: #{label_smoothing_loss.1} parent=0 // pred_fallthru
    _
  %s27 = sadd.s32 0, 0
  %s28 = smul.u32 2, %s27
  %p29 = scmp.lt.s32.totalorder %s28, 1
  %s30 = scalar_select %p29, %s28, 1
  %s31 = smul.addr %s30, 8
  %s32 = scalar_lea.vmem %s0, %s31
  %s33 = sadd.s32 0, 0
  %s34 = smul.u32 2, %s33
  %p35 = scmp.lt.s32.totalorder %s34, 1
  %s36 = scalar_select %p35, %s34, 1
  %s37 = smul.addr %s36, 8
  %s38 = scalar_lea.vmem %s1, %s37
  %s39 = sadd.s32 0, 0
  %s40 = smul.u32 2, %s39
  %p41 = scmp.lt.s32.totalorder %s40, 1
  %s42 = scalar_select %p41, %s40, 1
  %s43 = smul.addr %s42, 8
  %s44 = scalar_lea.vmem %s0, %s43
  %s45 = sadd.s32 0, 0
  %s46 = smul.u32 2, %s45
  %s47 = sadd.s32 0, 0
  %s48 = smul.u32 2, %s47
  %p49 = scmp.lt.s32.totalorder %s48, 1
  %s50 = scalar_select %p49, %s48, 1
  %s51 = smul.addr %s50, 8
  %s52 = scalar_lea.vmem %s1, %s51
  %s53 = sadd.s32 0, 0
  %s54 = smul.u32 2, %s53
  %p55 = scmp.eq.s32.totalorder 0, 0
  // Predicated region
  $region10: #{label_smoothing_loss.1} parent=0 // pred_check
    %p56 = pneg %p55
  $region11: #{label_smoothing_loss.1} parent=0 // pred_check_branch
    %58 = sbr.rel (%p56) target = $region13
  $region12: #{label_smoothing_loss.1} parent=0 // pred_region
    %59 = vst [vmem:[%s2] sm:$0xff] 0.0
  $region13: #{label_smoothing_loss.1} parent=0 // pred_fallthru
    _
  %v60 = vld [vmem:[%s44] sm:$0xff]
  %v61 = vld [vmem:[%s44 + $0x8] sm:$0xff]
  %v62 = vld [vmem:[%s52] sm:$0xff]
  %v63 = vld [vmem:[%s52 + $0x8] sm:$0xff]
  %v64 = vsub.f32 %v60, %v62
  %v65 = vsub.f32 %v61, %v63
  %v66 = vmul.f32 %v64, %v64
  %v67 = vmul.f32 %v65, %v65
  %v68 = vadd.f32 %v66, %v67
  %v69 = vrot.slane %v68, 4
  %v70 = vadd.f32 %v68, %v69
  %v71 = vrot.slane %v70, 2
  %v72 = vadd.f32 %v70, %v71
  %v73 = vrot.slane %v72, 1
  %v74 = vadd.f32 %v72, %v73
  %vm75 = vcmask 1040384
  %v76 = vsel %vm75, %v74, 0.0
  %v77 = vld [vmem:[%s2] sm:$0xff]
  %v78 = vadd.f32 %v77, %v76
  %79 = vst [vmem:[%s2] sm:$0xff] %v78
  // Predicated region
  $region14: #{label_smoothing_loss.1} parent=0 // pred_check
    _
  $region15: #{label_smoothing_loss.1} parent=0 // pred_check_branch
    %81 = sbr.rel (0) target = $region17
  $region16: #{label_smoothing_loss.1} parent=0 // pred_region
    _
  $region17: #{label_smoothing_loss.1} parent=0 // pred_fallthru
    _
  // Predicated region
  $region18: #{label_smoothing_loss.1} parent=0 // pred_check
    _
  $region19: #{label_smoothing_loss.1} parent=0 // pred_check_branch
    %83 = sbr.rel (0) target = $region21
  $region20: #{label_smoothing_loss.1} parent=0 // pred_region
    _
  $region21: #{label_smoothing_loss.1} parent=0 // pred_fallthru
    _

</llo_original>
